<compile_context>
chip_gen: v7x
topology: tpu7x:2x2x1
jax: 0.10.0
libtpu: 0.0.40
codegen_flags: <defaults>
</compile_context>

<pallas_src>
import functools

import numpy as np

import jax
import jax.numpy as jnp
from jax.experimental import pallas as pl
from jax.experimental.pallas import tpu as pltpu


_TAPS = tuple((dy, dx) for dy in (-1, 0, 1) for dx in (-1, 0, 1))
_MASK_ROWS = 16   # mask block padded to a sublane-aligned row count inside the constants


# ------------------------------ Pallas kernel -------------------------------

def _decoder4_kernel(const_ref, fin_ref, out_ref, *, H, W, Btile, M, cd, offs, roll_sgn):
    """Whole Decoder4 forward for one batch-tile, activations kept in VMEM.

    Layout: activations are (C, N) with N = Btile*H*W -- channels on sublanes, packed
    pixels on lanes.  const_ref rows: [0:9) tap masks, then per-layer packed weights
    (Cout rows each); a weight row is [9 per-tap (Cin) blocks | bias | PReLU alpha].
    """
    HW = H * W
    N = Btile * HW
    off_w0, off_w1, off_w2, off_w3, off_w4, off_w5, off_wd = offs

    masks = const_ref[0:9, 0:N]                       # (9, N) border-validity masks

    def conv(x, row0, cout, apply_prelu, residual=None):
        cin = x.shape[0]
        w_full = const_ref[row0:row0 + cout, :]
        cols = []
        for t, (dy, dx) in enumerate(_TAPS):
            s = dy * W + dx                           # flat-pixel offset of this tap
            if s == 0:
                cols.append(x)
            else:
                # shifted[c, i] == x[c, i + s]; invalid/wrapped positions zeroed by mask.
                shifted = pltpu.roll(x, ((-s) * roll_sgn) % N, 1)
                cols.append(shifted * masks[t:t + 1, :])
        im2col = jnp.concatenate(cols, axis=0)        # (9*cin, N), tap-major rows
        y = jnp.dot(w_full[:, :9 * cin], im2col,
                    preferred_element_type=jnp.float32)
        y = y + w_full[:, 9 * cin:9 * cin + 1]        # bias column
        if residual is not None:
            y = y + residual
        if apply_prelu:
            a = w_full[:, 9 * cin + 1:9 * cin + 2]    # alpha column
            y = jnp.where(y >= 0.0, y, a * y)
        return y

    x_in = fin_ref[0]                                 # (c0p, N), channel-padded input

    x0 = conv(x_in, off_w0, M, True)                  # convrelu(2C+1, M)
    o = conv(x0, off_w1, M, True)                     # ResBlock conv1 + PReLU
    o = conv(o, off_w2, M, True)                      # conv2 + PReLU (splice via identity rows)
    o = conv(o, off_w3, M, True)                      # conv3 + PReLU
    o = conv(o, off_w4, M, True)                      # conv4 + PReLU (splice via identity rows)
    o = conv(o, off_w5, M, True, residual=x0)         # prelu(x0 + conv5(out))

    out_ref[0] = conv(o, off_wd, 4 * cd, False)       # 4-phase deconv -> (4*cd, N)


# -------------------------- roll direction probe -----------------------------

@functools.lru_cache(maxsize=1)
def _probe_roll_sign():
    """Return +1 if pltpu.roll matches np.roll (out[i] = x[(i - shift) % n]), else -1.

    One-time setup cost (tiny kernel), done before jit of the real forward.
    """
    def k(x_ref, o_ref):
        o_ref[...] = pltpu.roll(x_ref[...], 1, 1)

    x = jnp.tile(jnp.arange(128, dtype=jnp.float32)[None, :], (8, 1))
    y = pl.pallas_call(k, out_shape=jax.ShapeDtypeStruct((8, 128), jnp.float32))(x)
    v = float(y[0, 0])
    if v == 127.0:
        return 1
    if v == 1.0:
        return -1
    raise RuntimeError(f"unexpected pltpu.roll behaviour (probe value {v})")


# ------------------------------ forward wrapper ------------------------------

def decoder4_forward(consts, f0, f1, embt, *, Btile, c0p, M, cd, offs, roll_sgn):
    """f0, f1: (B, C, H, W); embt: (B, 1, 1, 1).  Returns (B, cd, 2H, 2W)."""
    B, C, H, W = f0.shape
    HW = H * W
    assert B % Btile == 0
    Bsteps = B // Btile
    N = Btile * HW
    c0 = 2 * C + 1

    parts = [f0, f1, jnp.broadcast_to(embt, (B, 1, H, W))]
    if c0p > c0:
        parts.append(jnp.zeros((B, c0p - c0, H, W), f0.dtype))
    f_in = jnp.concatenate(parts, axis=1).reshape(B, c0p, HW)
    # pack Btile images onto the lane axis: (Bsteps, c0p, Btile*HW)
    f_in = f_in.reshape(Bsteps, Btile, c0p, HW).transpose(0, 2, 1, 3).reshape(Bsteps, c0p, N)

    kernel = functools.partial(_decoder4_kernel, H=H, W=W, Btile=Btile, M=M, cd=cd,
                               offs=offs, roll_sgn=roll_sgn)

    out_flat = pl.pallas_call(
        kernel,
        out_shape=jax.ShapeDtypeStruct((Bsteps, 4 * cd, N), jnp.float32),
        grid=(Bsteps,),
        in_specs=[
            pl.BlockSpec(consts.shape, lambda b: (0, 0)),      # packed masks + weights
            pl.BlockSpec((1, c0p, N), lambda b: (b, 0, 0)),    # input activations
        ],
        out_specs=pl.BlockSpec((1, 4 * cd, N), lambda b: (b, 0, 0)),
        compiler_params=pltpu.CompilerParams(dimension_semantics=("parallel",)),
    )(consts, f_in)

    # Unpack: row p*cd+co, column bt*HW + m*W + n, phase p=r*2+c -> out[b, co, 2m+r, 2n+c]
    y = out_flat.reshape(Bsteps, 2, 2, cd, Btile, H, W)
    y = jnp.transpose(y, (0, 4, 3, 5, 1, 6, 2)).reshape(B, cd, 2 * H, 2 * W)
    return y


# ------------------------- parameter init & packing --------------------------

def init_raw_params(key, c_feat=4, c_mid=8, c_inner=4, c_out=6):
    """Raw PyTorch-layout parameters for Decoder4."""
    ks = jax.random.split(key, 24)

    def conv_p(i, cout, cin):
        return dict(
            w=jax.random.normal(ks[i], (cout, cin, 3, 3), jnp.float32) * 0.1,
            b=jax.random.normal(ks[i + 1], (cout,), jnp.float32) * 0.1,
            a=0.1 + 0.2 * jax.random.uniform(ks[i + 2], (cout,), jnp.float32),
        )

    c_in0 = 2 * c_feat + 1
    return dict(
        conv0=conv_p(0, c_mid, c_in0),        # convrelu(2C+1, M)
        conv1=conv_p(3, c_mid, c_mid),        # ResBlock.conv1
        conv2=conv_p(6, c_inner, c_inner),    # ResBlock.conv2
        conv3=conv_p(9, c_mid, c_mid),        # ResBlock.conv3
        conv4=conv_p(12, c_inner, c_inner),   # ResBlock.conv4
        conv5=conv_p(15, c_mid, c_mid),       # ResBlock.conv5; 'a' = ResBlock.prelu alpha
        deconv=dict(                          # ConvTranspose2d(M, Cd, 4, 2, 1): (in, out, kh, kw)
            w=jax.random.normal(ks[18], (c_mid, c_out, 4, 4), jnp.float32) * 0.1,
            b=jax.random.normal(ks[19], (c_out,), jnp.float32) * 0.1,
        ),
    )


def make_tap_masks(H, W):
    m = np.zeros((9, H * W), np.float32)
    yy, xx = np.meshgrid(np.arange(H), np.arange(W), indexing="ij")
    for t, (dy, dx) in enumerate(_TAPS):
        valid = (yy + dy >= 0) & (yy + dy < H) & (xx + dx >= 0) & (xx + dx < W)
        m[t] = valid.astype(np.float32).reshape(-1)
    return m


def _pack_tapmajor(w, b, a):
    """(Cout,Cin,3,3) -> (Cout, 9*Cin + 2): per-tap blocks | bias | PReLU alpha."""
    w, b, a = np.asarray(w), np.asarray(b), np.asarray(a)
    cout, cin = w.shape[:2]
    wT = np.transpose(w, (0, 2, 3, 1)).reshape(cout, 9 * cin)   # col = (ky*3+kx)*Cin + ci
    return np.concatenate([wT, b.reshape(cout, 1), a.reshape(cout, 1)],
                          axis=1).astype(np.float32)


def _pack_padded_identity(p, c_full):
    """Embed a (c,c) conv into the last channels of (c_full,c_full); the top c_full-c
    output rows become exact pass-through (center-tap identity, bias 0, alpha 1), so the
    ResBlock channel splice is folded into the weight with no in-kernel mask math."""
    w, b, a = np.asarray(p["w"]), np.asarray(p["b"]), np.asarray(p["a"])
    c = w.shape[0]
    wf = np.zeros((c_full, c_full, 3, 3), np.float32)
    wf[c_full - c:, c_full - c:] = w
    for r in range(c_full - c):
        wf[r, r, 1, 1] = 1.0
    bf = np.zeros((c_full,), np.float32); bf[c_full - c:] = b
    af = np.ones((c_full,), np.float32);  af[c_full - c:] = a
    return _pack_tapmajor(wf, bf, af)


def pack_deconv(w_t, b):
    """ConvTranspose2d(Cin,Cout,4,2,1) -> 4 output phases as (4*Cout, 9*Cin + 2)."""
    w_t, b = np.asarray(w_t), np.asarray(b)
    cin, cout = w_t.shape[:2]
    wd = np.zeros((4 * cout, 9 * cin + 2), np.float32)
    # phase row-parity r uses (ky, tap-dy-index); same for columns.
    pairs = {0: [(1, 1), (3, 0)], 1: [(0, 2), (2, 1)]}
    for r in range(2):
        for c in range(2):
            p = r * 2 + c
            for ky, dyi in pairs[r]:
                for kx, dxi in pairs[c]:
                    t = dyi * 3 + dxi
                    wd[p * cout:(p + 1) * cout, t * cin:(t + 1) * cin] = w_t[:, :, ky, kx].T
    wd[:, 9 * cin] = np.tile(b, 4)
    return wd


def pack_constants(raw, H, W, Btile, c0p):
    """Pack tap masks + all layer weights into ONE (rows, ncols) f32 array.

    Row layout: [0:9) masks (lane width N=Btile*H*W), rows [16:) the per-layer weight
    blocks.  Returns (consts, row_offsets)."""
    M = raw["conv1"]["w"].shape[0]
    cd = raw["deconv"]["w"].shape[1]
    HW = H * W
    N = Btile * HW

    # conv0, input channels zero-padded to c0p (sublane-aligned im2col blocks)
    c_in0 = np.asarray(raw["conv0"]["w"]).shape[1]
    w0 = np.zeros((M, c0p, 3, 3), np.float32)
    w0[:, :c_in0] = np.asarray(raw["conv0"]["w"])

    blocks = [
        _pack_tapmajor(w0, raw["conv0"]["b"], raw["conv0"]["a"]),
        _pack_tapmajor(raw["conv1"]["w"], raw["conv1"]["b"], raw["conv1"]["a"]),
        _pack_padded_identity(raw["conv2"], M),
        _pack_tapmajor(raw["conv3"]["w"], raw["conv3"]["b"], raw["conv3"]["a"]),
        _pack_padded_identity(raw["conv4"], M),
        _pack_tapmajor(raw["conv5"]["w"], raw["conv5"]["b"], raw["conv5"]["a"]),
        pack_deconv(raw["deconv"]["w"], raw["deconv"]["b"]),
    ]

    ncols = max([N] + [blk.shape[1] for blk in blocks])
    total_rows = _MASK_ROWS + sum(blk.shape[0] for blk in blocks)
    total_rows = int(np.ceil(total_rows / 8) * 8)

    consts = np.zeros((total_rows, ncols), np.float32)
    consts[0:9, :N] = np.tile(make_tap_masks(H, W), (1, Btile))
    r = _MASK_ROWS
    offs = []
    for blk in blocks:
        offs.append(r)
        consts[r:r + blk.shape[0], :blk.shape[1]] = blk
        r += blk.shape[0]
    return jnp.asarray(consts), tuple(offs)


# --------------------------- pure-JAX reference ------------------------------

def _prelu_nchw(x, a):
    return jnp.where(x >= 0, x, a[None, :, None, None] * x)


def _conv3x3_nchw(x, w, b):
    y = jax.lax.conv_general_dilated(
        x, w, window_strides=(1, 1), padding=((1, 1), (1, 1)),
        dimension_numbers=("NCHW", "OIHW", "NCHW"),
        precision=jax.lax.Precision.HIGHEST)
    return y + b[None, :, None, None]


def _deconv4x4_s2_nchw(x, w_t, b):
    w = jnp.flip(jnp.transpose(w_t, (1, 0, 2, 3)), axis=(2, 3))
    y = jax.lax.conv_general_dilated(
        x, w, window_strides=(1, 1), padding=((2, 2), (2, 2)), lhs_dilation=(2, 2),
        dimension_numbers=("NCHW", "OIHW", "NCHW"),
        precision=jax.lax.Precision.HIGHEST)
    return y + b[None, :, None, None]


def decoder4_ref(raw, f0, f1, embt):
    B, C, H, W = f0.shape
    f_in = jnp.concatenate([f0, f1, jnp.broadcast_to(embt, (B, 1, H, W))], axis=1)
    p = raw["conv0"]
    x = _prelu_nchw(_conv3x3_nchw(f_in, p["w"], p["b"]), p["a"])
    p1, p2, p3, p4, p5 = raw["conv1"], raw["conv2"], raw["conv3"], raw["conv4"], raw["conv5"]
    c2 = p2["w"].shape[0]
    c4 = p4["w"].shape[0]
    out = _prelu_nchw(_conv3x3_nchw(x, p1["w"], p1["b"]), p1["a"])
    t1 = _prelu_nchw(_conv3x3_nchw(out[:, -c2:], p2["w"], p2["b"]), p2["a"])
    out = jnp.concatenate([out[:, :-c2], t1], axis=1)
    out = _prelu_nchw(_conv3x3_nchw(out, p3["w"], p3["b"]), p3["a"])
    t2 = _prelu_nchw(_conv3x3_nchw(out[:, -c4:], p4["w"], p4["b"]), p4["a"])
    out = jnp.concatenate([out[:, :-c4], t2], axis=1)
    out = _prelu_nchw(x + _conv3x3_nchw(out, p5["w"], p5["b"]), p5["a"])
    return _deconv4x4_s2_nchw(out, raw["deconv"]["w"], raw["deconv"]["b"])


# ----------------------------------- main ------------------------------------

if __name__ == "__main__":
    B, C, H, W = 4, 4, 16, 16
    key = jax.random.PRNGKey(0)
    kp, k0, k1, k2 = jax.random.split(key, 4)

    raw = init_raw_params(kp, c_feat=C)

    # Batch-tile choice: pack batch onto lanes but keep >= 2 grid steps (v7x has 2 TCs).
    Btile = B // 2 if (B % 2 == 0 and B >= 2) else 1
    c0 = 2 * C + 1
    c0p = int(np.ceil(c0 / 8) * 8)          # pad input channels to a sublane multiple

    consts, offs = pack_constants(raw, H, W, Btile, c0p)
    roll_sgn = _probe_roll_sign()
    M = raw["conv1"]["w"].shape[0]
    cd = raw["deconv"]["w"].shape[1]

    f0 = jax.random.normal(k0, (B, C, H, W), jnp.float32)
    f1 = jax.random.normal(k1, (B, C, H, W), jnp.float32)
    embt = jax.random.uniform(k2, (B, 1, 1, 1), jnp.float32)

    fwd = jax.jit(functools.partial(decoder4_forward, Btile=Btile, c0p=c0p, M=M, cd=cd,
                                    offs=offs, roll_sgn=roll_sgn))
    out = jax.block_until_ready(fwd(consts, f0, f1, embt))

    ref = decoder4_ref(raw, f0, f1, embt)

    assert out.shape == (B, cd, 2 * H, 2 * W), out.shape
    assert bool(jnp.all(jnp.isfinite(out)))
    max_err = float(jnp.max(jnp.abs(out - ref)))
    assert max_err < 5e-2, f"mismatch vs XLA reference: max |err| = {max_err}"
    print("KERNEL_OK")
</pallas_src>

<mosaic_0001>
module attributes {stable_mosaic.version = 11 : i64} {
  func.func @k(%arg0: memref<8x128xf32, #tpu.memory_space<vmem>>, %arg1: memref<8x128xf32, #tpu.memory_space<vmem>>) attributes {dimension_semantics = [], scalar_prefetch = 0 : i64, scratch_operands = 0 : i64, tpu.core_type = #tpu.core_type<tc>} {
    %c0 = arith.constant 0 : index
    %c0_0 = arith.constant 0 : index
    %0 = vector.load %arg0[%c0, %c0_0] : memref<8x128xf32, #tpu.memory_space<vmem>>, vector<8x128xf32>
    %c1_i32 = arith.constant 1 : i32
    %1 = tpu.dynamic_rotate %0 by %c1_i32 dim 1 : vector<8x128xf32>, i32 -> vector<8x128xf32>
    %c0_1 = arith.constant 0 : index
    %c0_2 = arith.constant 0 : index
    %2 = vector.load %arg1[%c0_1, %c0_2] : memref<8x128xf32, #tpu.memory_space<vmem>>, vector<8x128xf32>
    tpu.vector_store %arg1[%c0_1, %c0_2], %1 {strides = array<i32>} : memref<8x128xf32, #tpu.memory_space<vmem>>, vector<8x128xf32>,
    return
  }
}

</mosaic_0001>

<llo_original>
// kernel: tpu_custom_call.1
$region0: #{tpu_custom_call.1}
  #allocation0 [shape = 'u32[]', space=smem, size = 0x4, offset = 0x4, fixed_abs, tag = 'smem constant byte address 0x4 - core index']
  #allocation1 [shape = 'u32[144,128]{1,0:T(1,128)}', space=vmem, size = 0x12000, scoped, tag = 'internal scratch']
  %s0 = inlined_call_operand.hbm [shape: f32[8,128], index: 0, kind: input, shape index: {}]
  %s1 = inlined_call_operand.hbm [shape: f32[8,128], index: 1, kind: output, shape index: {}]
  %s2 = sld [smem:[#allocation0]]
  $region18: #{tpu_custom_call.1} parent=0
    _
  %s4 = ssub.s32 1, %s2
  %s5 = scalar_select 0, %s4, %s2
  $region1: #{tpu_custom_call.1} parent=0
    #allocation2 [shape = 'u8[4096]{0}', space=vmem, size = 0x1000, scoped, tag = 'input window, operand 0, single buffered']
    #allocation3 [shape = 's32[1]{0}', space=sflag, size = 0x4, scoped, tag = 'scoped memory for tpu_custom_call.1']
    #allocation4 [shape = 's32[1]{0}', space=sflag, size = 0x4, scoped, tag = 'scoped memory for tpu_custom_call.1']
    #allocation5 [shape = 'u8[4096]{0}', space=vmem, size = 0x1000, scoped, tag = 'output window, operand 0, single buffered']
    %6 = vsyncpa [#allocation3], 0
    %7 = vsyncpa [#allocation4], 0
    // Predicated region
    $region2: #{tpu_custom_call.1} parent=1 // pred_check
      _
    $region3: #{tpu_custom_call.1} parent=1 // pred_check_branch
      %9 = sbr.rel (0) target = $region5
    $region4: #{tpu_custom_call.1} parent=1 // pred_region
      %s11 = ssub.s32 128, 128
      %12 = vsyncadd [#allocation3], %s11
      %s14 = sshll.u32 [#allocation2], 4
      %s15 = int_to_ptr.vmem [resolvable:$true] %s14
      %17 = dma.hbm_to_vmem [thread:$0]  %s0, 128, %s15, [#allocation3]
    $region5: #{tpu_custom_call.1} parent=1 // pred_fallthru
      _
    // Predicated region
    $region6: #{tpu_custom_call.1} parent=1 // pred_check
      _
    $region7: #{tpu_custom_call.1} parent=1 // pred_check_branch
      %19 = sbr.rel (0) target = $region9
    $region8: #{tpu_custom_call.1} parent=1 // pred_region
      %20 = dma.done [#allocation3], 128
    $region9: #{tpu_custom_call.1} parent=1 // pred_fallthru
      _
    %v21 = vld [vmem:[#allocation2] sm:$0xff]
    %22 = vrot.lane.b32.xlu0 %v21, 1
    %v23 = vpop.permute.xlu0 %22
    %24 = vst [vmem:[#allocation5] sm:$0xff] %v23
    // Predicated region
    $region10: #{tpu_custom_call.1} parent=1 // pred_check
      _
    $region11: #{tpu_custom_call.1} parent=1 // pred_check_branch
      %26 = sbr.rel (0) target = $region13
    $region12: #{tpu_custom_call.1} parent=1 // pred_region
      %s28 = ssub.s32 128, 128
      %29 = vsyncadd [#allocation4], %s28
      %s31 = sshll.u32 [#allocation5], 4
      %s32 = int_to_ptr.vmem [resolvable:$true] %s31
      %34 = dma.vmem_to_hbm [thread:$0]  %s32, 128, %s1, [#allocation4]
    $region13: #{tpu_custom_call.1} parent=1 // pred_fallthru
      _
    // Predicated region
    $region14: #{tpu_custom_call.1} parent=1 // pred_check
      _
    $region15: #{tpu_custom_call.1} parent=1 // pred_check_branch
      %36 = sbr.rel (0) target = $region17
    $region16: #{tpu_custom_call.1} parent=1 // pred_region
      %37 = dma.done [#allocation4], 128
    $region17: #{tpu_custom_call.1} parent=1 // pred_fallthru
      _
    %38 = vsyncpa [#allocation3], 1
    %39 = vsyncpa [#allocation4], 1

</llo_original>
